<compile_context>
chip_gen: v7x
topology: tpu7x:2x2x1
jax: 0.10.0
libtpu: 0.0.40
codegen_flags: <defaults>
</compile_context>

<pallas_src>
import functools

import numpy as np
import jax
import jax.numpy as jnp
from jax.experimental import pallas as pl
from jax.experimental.pallas import tpu as pltpu


def _round_up(x: int, m: int) -> int:
    return (x + m - 1) // m * m


# ---------------------------------------------------------------------------
# Pallas kernels
# ---------------------------------------------------------------------------
def _matmul_bias_kernel(a_ref, w_ref, b_ref, o_ref):
    # a: (TM, K), w: (K, N), b: (1, N) -> o: (TM, N)   (MXU matmul, f32 acc)
    o_ref[...] = (
        jnp.dot(a_ref[...], w_ref[...], preferred_element_type=jnp.float32)
        + b_ref[...]
    )


def _pallas_matmul_bias(a, w, b):
    """(M, K) @ (K, N) + b with a parallel grid over M tiles."""
    M, K = a.shape
    N = w.shape[1]
    TM = min(256, _round_up(max(M, 1), 8))
    Mp = _round_up(M, TM)
    if Mp != M:
        a = jnp.pad(a, ((0, Mp - M), (0, 0)))
    out = pl.pallas_call(
        _matmul_bias_kernel,
        out_shape=jax.ShapeDtypeStruct((Mp, N), jnp.float32),
        grid=(Mp // TM,),
        in_specs=[
            pl.BlockSpec((TM, K), lambda i: (i, 0)),
            pl.BlockSpec((K, N), lambda i: (0, 0)),
            pl.BlockSpec((1, N), lambda i: (0, 0)),
        ],
        out_specs=pl.BlockSpec((TM, N), lambda i: (i, 0)),
        compiler_params=pltpu.CompilerParams(
            dimension_semantics=("parallel",)),
    )(a, w, b.reshape(1, N))
    return out[:M]


def _resize_matmul_kernel(x_ref, m_ref, o_ref):
    # x: (BC_pad, H*W), m: (H*W, h*w) -> o: (BC_pad, h*w)
    o_ref[...] = jnp.dot(x_ref[...], m_ref[...],
                         preferred_element_type=jnp.float32)


# ---------------------------------------------------------------------------
# Convolution / transposed convolution (im2col in wrapper, matmul in Pallas)
# ---------------------------------------------------------------------------
def _conv2d_core(x, w, b, stride, padding):
    # x: (B, Cin, H, W); w: (Cout, Cin, k, k); b: (Cout,)
    B, C, H, W = x.shape
    Cout, _, k, _ = w.shape
    Ho = (H + 2 * padding - k) // stride + 1
    Wo = (W + 2 * padding - k) // stride + 1
    xp = jnp.pad(x, ((0, 0), (0, 0), (padding, padding), (padding, padding)))
    cols = []
    for di in range(k):
        for dj in range(k):
            cols.append(
                xp[:, :,
                   di:di + stride * (Ho - 1) + 1:stride,
                   dj:dj + stride * (Wo - 1) + 1:stride])
    cols = jnp.stack(cols, axis=2)             # (B, C, k*k, Ho, Wo)
    cols = cols.transpose(0, 3, 4, 1, 2)       # (B, Ho, Wo, C, k*k)
    a = cols.reshape(B * Ho * Wo, C * k * k)   # M = B*Ho*Wo, K = C*k*k
    w2 = w.reshape(Cout, C * k * k).T          # (K, Cout)
    out = _pallas_matmul_bias(a, w2, b)        # (M, Cout)
    return out.reshape(B, Ho, Wo, Cout).transpose(0, 3, 1, 2)


@functools.partial(jax.jit, static_argnames=("stride", "padding"))
def _conv2d_impl(x, w, b, *, stride, padding):
    return _conv2d_core(x, w, b, stride, padding)


@jax.jit
def _conv_transpose2d_impl(x, w, b):
    # nn.ConvTranspose2d(kernel_size=4, stride=2, padding=1):
    # stride-dilate the input, flip the kernel, swap in/out channels, then
    # run a stride-1 conv with padding = k - 1 - p = 2.
    B, C, H, W = x.shape
    xd = jnp.zeros((B, C, 2 * H - 1, 2 * W - 1), x.dtype)
    xd = xd.at[:, :, ::2, ::2].set(x)
    wc = jnp.transpose(w, (1, 0, 2, 3))[:, :, ::-1, ::-1]
    return _conv2d_core(xd, wc, b, stride=1, padding=2)


# ---------------------------------------------------------------------------
# Bilinear interpolation (align_corners=False), kron-fused matmul form
# ---------------------------------------------------------------------------
def _bilinear_matrix(out_size: int, in_size: int) -> np.ndarray:
    i = np.arange(out_size)
    src = (i + 0.5) * (in_size / out_size) - 0.5
    src = np.maximum(src, 0.0)
    i0 = np.minimum(np.floor(src).astype(np.int64), in_size - 1)
    i1 = np.minimum(i0 + 1, in_size - 1)
    l1 = (src - i0).astype(np.float32)
    l0 = 1.0 - l1
    W = np.zeros((out_size, in_size), dtype=np.float32)
    W[i, i0] += l0
    W[i, i1] += l1
    return W


@functools.partial(jax.jit, static_argnames=("out_h", "out_w"))
def _bilinear_resize_impl(x, *, out_h, out_w):
    # All B*C images resized in a single grid step: (BC, H*W) @ (H*W, h*w).
    # (kron-fused form is only used because H*W x h*w easily fits VMEM here.)
    B, C, H, W = x.shape
    wh = _bilinear_matrix(out_h, H)
    ww = _bilinear_matrix(out_w, W)
    m = jnp.asarray(np.kron(wh, ww).T)          # (H*W, out_h*out_w)
    bc = B * C
    bcp = _round_up(bc, 8)
    x2 = x.reshape(bc, H * W)
    if bcp != bc:
        x2 = jnp.pad(x2, ((0, bcp - bc), (0, 0)))
    out = pl.pallas_call(
        _resize_matmul_kernel,
        out_shape=jax.ShapeDtypeStruct((bcp, out_h * out_w), jnp.float32),
        grid=(1,),
        in_specs=[
            pl.BlockSpec((bcp, H * W), lambda i: (0, 0)),
            pl.BlockSpec((H * W, out_h * out_w), lambda i: (0, 0)),
        ],
        out_specs=pl.BlockSpec((bcp, out_h * out_w), lambda i: (0, 0)),
        compiler_params=pltpu.CompilerParams(
            dimension_semantics=("parallel",)),
    )(x2, m)
    return out[:bc].reshape(B, C, out_h, out_w)


# ---------------------------------------------------------------------------
# Parameter initialization (mirrors the PyTorch module structure)
# ---------------------------------------------------------------------------
def _init_conv(key, cin, cout, k):
    kw, kb = jax.random.split(key)
    bound = 1.0 / np.sqrt(cin * k * k)
    w = jax.random.uniform(kw, (cout, cin, k, k), jnp.float32, -bound, bound)
    b = jax.random.uniform(kb, (cout,), jnp.float32, -bound, bound)
    return {"w": w, "b": b}


def _init_conv_t(key, cin, cout, k=4):
    kw, kb = jax.random.split(key)
    bound = 1.0 / np.sqrt(cin * k * k)
    w = jax.random.uniform(kw, (cin, cout, k, k), jnp.float32, -bound, bound)
    b = jax.random.uniform(kb, (cout,), jnp.float32, -bound, bound)
    return {"w": w, "b": b}


def _init_resblock(key, c):
    k1, k2 = jax.random.split(key)
    return {"conv1": _init_conv(k1, c, c, 3), "conv2": _init_conv(k2, c, c, 3)}


def _init_encoder(key, inchannel):
    ks = jax.random.split(key, 15)
    return {
        "layer1": _init_conv(ks[0], inchannel, 32, 3),
        "layer2": _init_resblock(ks[1], 32),
        "layer3": _init_resblock(ks[2], 32),
        "layer4": _init_resblock(ks[3], 32),
        "layer4p": _init_resblock(ks[4], 32),
        "layer5": _init_conv(ks[5], 32, 64, 3),
        "layer6": _init_resblock(ks[6], 64),
        "layer7": _init_resblock(ks[7], 64),
        "layer8": _init_resblock(ks[8], 64),
        "layer8p": _init_resblock(ks[9], 64),
        "layer9": _init_conv(ks[10], 64, 128, 3),
        "layer10": _init_resblock(ks[11], 128),
        "layer11": _init_resblock(ks[12], 128),
        "layer12": _init_resblock(ks[13], 128),
        "layer12p": _init_resblock(ks[14], 128),
    }


def _init_decoder(key, outchannel=3):
    ks = jax.random.split(key, 15)
    return {
        "layer13p": _init_resblock(ks[0], 128),
        "layer13": _init_resblock(ks[1], 128),
        "layer14": _init_resblock(ks[2], 128),
        "layer15": _init_resblock(ks[3], 128),
        "layer16": _init_conv_t(ks[4], 128, 64),
        "layer17p": _init_resblock(ks[5], 64),
        "layer17": _init_resblock(ks[6], 64),
        "layer18": _init_resblock(ks[7], 64),
        "layer19": _init_resblock(ks[8], 64),
        "layer20": _init_conv_t(ks[9], 64, 32),
        "layer21p": _init_resblock(ks[10], 32),
        "layer21": _init_resblock(ks[11], 32),
        "layer22": _init_resblock(ks[12], 32),
        "layer23": _init_resblock(ks[13], 32),
        "layer24": _init_conv(ks[14], 32, outchannel, 3),
    }


def _init_mode(key):
    k1, k2, k3, k4 = jax.random.split(key, 4)
    return {
        "encode1": _init_encoder(k1, 3),
        "encode2": _init_encoder(k2, 6),
        "decoder1": _init_decoder(k3),
        "decoder2": _init_decoder(k4),
    }


# ---------------------------------------------------------------------------
# Forward pass (matches PyTorch `Mode.forward`)
# ---------------------------------------------------------------------------
def _conv(p, x, stride=1, padding=1):
    return _conv2d_impl(x, p["w"], p["b"], stride=stride, padding=padding)


def _conv_t(p, x):
    return _conv_transpose2d_impl(x, p["w"], p["b"])


def _resblock(p, x):
    net = _conv(p["conv1"], x)
    net = jnp.maximum(net, 0.0)          # relu_
    net = _conv(p["conv2"], net)
    return net + x


def _encoder(p, x):
    x = _conv(p["layer1"], x)
    x = _resblock(p["layer2"], x)
    x = _resblock(p["layer3"], x)
    x = _resblock(p["layer4"], x)
    enc1_4 = _resblock(p["layer4p"], x)
    x = _conv(p["layer5"], enc1_4, stride=2)
    x = _resblock(p["layer6"], x)
    x = _resblock(p["layer7"], x)
    x = _resblock(p["layer8"], x)
    enc2_4 = _resblock(p["layer8p"], x)
    x = _conv(p["layer9"], enc2_4, stride=2)
    x = _resblock(p["layer10"], x)
    x = _resblock(p["layer11"], x)
    x = _resblock(p["layer12"], x)
    x = _resblock(p["layer12p"], x)
    return enc1_4, enc2_4, x


def _decoder(p, enc1_4, enc2_4, x):
    x = _resblock(p["layer13p"], x)
    x = _resblock(p["layer13"], x)
    x = _resblock(p["layer14"], x)
    x = _resblock(p["layer15"], x)
    x = _conv_t(p["layer16"], x)
    x = _resblock(p["layer17p"], x + enc2_4)
    x = _resblock(p["layer17"], x)
    x = _resblock(p["layer18"], x)
    x = _resblock(p["layer19"], x)
    x = _conv_t(p["layer20"], x)
    x = _resblock(p["layer21p"], x + enc1_4)
    x = _resblock(p["layer21"], x)
    x = _resblock(p["layer22"], x)
    x = _resblock(p["layer23"], x)
    x = _conv(p["layer24"], x)
    return x


def _encode_decode_level(params, x, last_scale_out):
    enc1_4, enc2_4, feature2 = _encoder(
        params["encode2"], jnp.concatenate([x, last_scale_out], axis=1))
    residual2 = _decoder(params["decoder2"], enc1_4, enc2_4, feature2)
    enc1_4, enc2_4, tmp = _encoder(params["encode1"], x + residual2)
    feature1 = tmp + feature2
    y = _decoder(params["decoder1"], enc1_4, enc2_4, feature1)
    return y


def mode_forward(params, x):
    # I3.detach() in the reference is a no-op for the forward pass.
    output = []
    _, _, H, W = x.shape
    B3 = _bilinear_resize_impl(x, out_h=H // 4, out_w=W // 4)
    I3 = _encode_decode_level(params, B3, B3)
    output.append(I3)
    B2 = _bilinear_resize_impl(x, out_h=H // 2, out_w=W // 2)
    I3u = _bilinear_resize_impl(I3, out_h=H // 2, out_w=W // 2)
    I2 = _encode_decode_level(params, B2, I3u)
    output.append(I2)
    I2u = _bilinear_resize_impl(I2, out_h=H, out_w=W)
    I1 = _encode_decode_level(params, x, I2u)
    output.append(I1)
    return output


if __name__ == "__main__":
    key = jax.random.PRNGKey(0)
    k_param, k_x = jax.random.split(key)
    params = _init_mode(k_param)
    x = jax.random.normal(k_x, (1, 3, 16, 16), dtype=jnp.float32)

    outs = mode_forward(params, x)
    for o in outs:
        o.block_until_ready()

    assert outs[0].shape == (1, 3, 4, 4)
    assert outs[1].shape == (1, 3, 8, 8)
    assert outs[2].shape == (1, 3, 16, 16)
    print("KERNEL_OK")
</pallas_src>

<mosaic_0001>
module attributes {stable_mosaic.version = 11 : i64} {
  func.func @_resize_matmul_kernel(%arg0: i32, %arg1: memref<8x256xf32, #tpu.memory_space<vmem>>, %arg2: memref<256x16xf32, #tpu.memory_space<vmem>>, %arg3: memref<8x16xf32, #tpu.memory_space<vmem>>) attributes {dimension_semantics = [#tpu.dimension_semantics<parallel>], iteration_bounds = array<i64: 1>, scalar_prefetch = 0 : i64, scratch_operands = 0 : i64, tpu.core_type = #tpu.core_type<tc>, window_params = [{pipeline_mode = #tpu.pipeline_mode<synchronous>, transform_indices = @transform_0, window_bounds = array<i64: 8, 256>}, {pipeline_mode = #tpu.pipeline_mode<synchronous>, transform_indices = @transform_1, window_bounds = array<i64: 256, 16>}, {pipeline_mode = #tpu.pipeline_mode<synchronous>, transform_indices = @transform_2, window_bounds = array<i64: 8, 16>}]} {
    %c0 = arith.constant 0 : index
    %c0_0 = arith.constant 0 : index
    %0 = vector.load %arg1[%c0, %c0_0] : memref<8x256xf32, #tpu.memory_space<vmem>>, vector<8x256xf32>
    %c0_1 = arith.constant 0 : index
    %c0_2 = arith.constant 0 : index
    %1 = vector.load %arg2[%c0_1, %c0_2] : memref<256x16xf32, #tpu.memory_space<vmem>>, vector<256x16xf32>
    %cst = arith.constant dense<0.000000e+00> : vector<8x16xf32>
    %2 = tpu.matmul %0, %1, %cst {dimension_numbers = #tpu.dot_dimension_numbers<[1], [0], [0], [1], [0, 0, 1, 1], [], []>} : vector<8x256xf32>, vector<256x16xf32>, vector<8x16xf32> -> vector<8x16xf32>
    %c0_3 = arith.constant 0 : index
    %c0_4 = arith.constant 0 : index
    %3 = vector.load %arg3[%c0_3, %c0_4] : memref<8x16xf32, #tpu.memory_space<vmem>>, vector<8x16xf32>
    tpu.vector_store %arg3[%c0_3, %c0_4], %2 {strides = array<i32>} : memref<8x16xf32, #tpu.memory_space<vmem>>, vector<8x16xf32>,
    return
  }
  func.func @transform_0(%arg0: i32) -> (i32, i32) {
    %c0_i32 = arith.constant 0 : i32
    %c0_i32_0 = arith.constant 0 : i32
    %c0_i32_1 = arith.constant 0 : i32
    return %c0_i32, %c0_i32_0 : i32, i32
  }
  func.func @transform_1(%arg0: i32) -> (i32, i32) {
    %c0_i32 = arith.constant 0 : i32
    %c0_i32_0 = arith.constant 0 : i32
    %c0_i32_1 = arith.constant 0 : i32
    return %c0_i32, %c0_i32_0 : i32, i32
  }
  func.func @transform_2(%arg0: i32) -> (i32, i32) {
    %c0_i32 = arith.constant 0 : i32
    %c0_i32_0 = arith.constant 0 : i32
    %c0_i32_1 = arith.constant 0 : i32
    return %c0_i32, %c0_i32_0 : i32, i32
  }
}

</mosaic_0001>

<llo_original>
// kernel: _bilinear_resize_impl.1
$region0: #{_bilinear_resize_impl.1}
  #allocation0 [shape = 'u32[]', space=smem, size = 0x4, offset = 0x4, fixed_abs, tag = 'smem constant byte address 0x4 - core index']
  #allocation1 [shape = 'u32[144,128]{1,0:T(1,128)}', space=vmem, size = 0x12000, scoped, tag = 'internal scratch']
  %s0 = inlined_call_operand.vmem [shape: f32[8,256], index: 0, kind: input, shape index: {}]
  %s1 = inlined_call_operand.hbm [shape: f32[256,16], index: 1, kind: input, shape index: {}]
  %s2 = inlined_call_operand.vmem [shape: f32[8,16], index: 2, kind: output, shape index: {}]
  %s3 = sld [smem:[#allocation0]]
  $region22: #{_bilinear_resize_impl.1} parent=0
    _
  %s5 = ssub.s32 1, %s3
  %s6 = scalar_select 0, %s5, %s3
  $region1: #{_bilinear_resize_impl.1} parent=0
    #allocation2 [shape = 'u8[131072]{0}', space=vmem, size = 0x20000, scoped, tag = 'input window, operand 1, single buffered']
    #allocation3 [shape = 's32[1]{0}', space=sflag, size = 0x4, scoped, tag = 'scoped memory for _bilinear_resize_impl.1']
    %7 = vsyncpa [#allocation3], 0
    // Predicated region
    $region2: #{_bilinear_resize_impl.1} parent=1 // pred_check
      _
    $region3: #{_bilinear_resize_impl.1} parent=1 // pred_check_branch
      %9 = sbr.rel (0) target = $region5
    $region4: #{_bilinear_resize_impl.1} parent=1 // pred_region
      _
    $region5: #{_bilinear_resize_impl.1} parent=1 // pred_fallthru
      _
    // Predicated region
    $region6: #{_bilinear_resize_impl.1} parent=1 // pred_check
      _
    $region7: #{_bilinear_resize_impl.1} parent=1 // pred_check_branch
      %11 = sbr.rel (0) target = $region9
    $region8: #{_bilinear_resize_impl.1} parent=1 // pred_region
      %s13 = ssub.s32 4096, 4096
      %14 = vsyncadd [#allocation3], %s13
      %s15 = sshll.u32 [#allocation2], 4
      %s16 = int_to_ptr.vmem [resolvable:$true] %s15
      %21 = dma.hbm_to_vmem [thread:$0]  %s1, 4096, %s16, [#allocation3], 128, 128, 8
    $region9: #{_bilinear_resize_impl.1} parent=1 // pred_fallthru
      _
    // Predicated region
    $region10: #{_bilinear_resize_impl.1} parent=1 // pred_check
      _
    $region11: #{_bilinear_resize_impl.1} parent=1 // pred_check_branch
      %23 = sbr.rel (0) target = $region13
    $region12: #{_bilinear_resize_impl.1} parent=1 // pred_region
      %24 = dma.done [#allocation3], 4096
    $region13: #{_bilinear_resize_impl.1} parent=1 // pred_fallthru
      _
    %v25 = vld [vmem:[%s0] sm:$0xff]
    %v26 = vld [vmem:[%s0 + $0x8] sm:$0xff]
    %v27 = vld [vmem:[#allocation2] sm:$0xff]
    %v28 = vld [vmem:[#allocation2 + $0x8] sm:$0xff]
    %v29 = vld [vmem:[#allocation2 + $0x10] sm:$0xff]
    %v30 = vld [vmem:[#allocation2 + $0x18] sm:$0xff]
    %v31 = vld [vmem:[#allocation2 + $0x20] sm:$0xff]
    %v32 = vld [vmem:[#allocation2 + $0x28] sm:$0xff]
    %v33 = vld [vmem:[#allocation2 + $0x30] sm:$0xff]
    %v34 = vld [vmem:[#allocation2 + $0x38] sm:$0xff]
    %v35 = vld [vmem:[#allocation2 + $0x40] sm:$0xff]
    %v36 = vld [vmem:[#allocation2 + $0x48] sm:$0xff]
    %v37 = vld [vmem:[#allocation2 + $0x50] sm:$0xff]
    %v38 = vld [vmem:[#allocation2 + $0x58] sm:$0xff]
    %v39 = vld [vmem:[#allocation2 + $0x60] sm:$0xff]
    %v40 = vld [vmem:[#allocation2 + $0x68] sm:$0xff]
    %v41 = vld [vmem:[#allocation2 + $0x70] sm:$0xff]
    %v42 = vld [vmem:[#allocation2 + $0x78] sm:$0xff]
    %v43 = vld [vmem:[#allocation2 + $0x80] sm:$0xff]
    %v44 = vld [vmem:[#allocation2 + $0x88] sm:$0xff]
    %v45 = vld [vmem:[#allocation2 + $0x90] sm:$0xff]
    %v46 = vld [vmem:[#allocation2 + $0x98] sm:$0xff]
    %v47 = vld [vmem:[#allocation2 + $0xa0] sm:$0xff]
    %v48 = vld [vmem:[#allocation2 + $0xa8] sm:$0xff]
    %v49 = vld [vmem:[#allocation2 + $0xb0] sm:$0xff]
    %v50 = vld [vmem:[#allocation2 + $0xb8] sm:$0xff]
    %v51 = vld [vmem:[#allocation2 + $0xc0] sm:$0xff]
    %v52 = vld [vmem:[#allocation2 + $0xc8] sm:$0xff]
    %v53 = vld [vmem:[#allocation2 + $0xd0] sm:$0xff]
    %v54 = vld [vmem:[#allocation2 + $0xd8] sm:$0xff]
    %v55 = vld [vmem:[#allocation2 + $0xe0] sm:$0xff]
    %v56 = vld [vmem:[#allocation2 + $0xe8] sm:$0xff]
    %v57 = vld [vmem:[#allocation2 + $0xf0] sm:$0xff]
    %v58 = vld [vmem:[#allocation2 + $0xf8] sm:$0xff]
    %59 = vmatprep.subr.mxu0 0.0
    %60 = vmatpush1.msra.mxu0 %v27
    %61 = vmatprep.subr.mxu0 0.0
    %62 = vmatpush1.msra.mxu0 %v28
    %63 = vmatprep.subr.mxu0 0.0
    %64 = vmatpush1.msra.mxu0 %v29
    %65 = vmatprep.subr.mxu0 0.0
    %66 = vmatpush1.msra.mxu0 %v30
    %67 = vmatprep.subr.mxu0 0.0
    %68 = vmatpush1.msra.mxu0 %v31
    %69 = vmatprep.subr.mxu0 0.0
    %70 = vmatpush1.msra.mxu0 %v32
    %71 = vmatprep.subr.mxu0 0.0
    %72 = vmatpush1.msra.mxu0 %v33
    %73 = vmatprep.subr.mxu0 0.0
    %74 = vmatpush1.msra.mxu0 %v34
    %75 = vmatprep.subr.mxu0 0.0
    %76 = vmatpush1.msra.mxu0 %v35
    %77 = vmatprep.subr.mxu0 0.0
    %78 = vmatpush1.msra.mxu0 %v36
    %79 = vmatprep.subr.mxu0 0.0
    %80 = vmatpush1.msra.mxu0 %v37
    %81 = vmatprep.subr.mxu0 0.0
    %82 = vmatpush1.msra.mxu0 %v38
    %83 = vmatprep.subr.mxu0 0.0
    %84 = vmatpush1.msra.mxu0 %v39
    %85 = vmatprep.subr.mxu0 0.0
    %86 = vmatpush1.msra.mxu0 %v40
    %87 = vmatprep.subr.mxu0 0.0
    %88 = vmatpush1.msra.mxu0 %v41
    %89 = vmatprep.subr.mxu0 0.0
    %90 = vmatpush1.msra.mxu0 %v42
    %91 = vmatprep.subr.mxu0 0.0
    %92 = vmatpush1.msra.mxu0 %v43
    %93 = vmatprep.subr.mxu0 0.0
    %94 = vmatpush1.msra.mxu0 %v44
    %95 = vmatprep.subr.mxu0 0.0
    %96 = vmatpush1.msra.mxu0 %v45
    %97 = vmatprep.subr.mxu0 0.0
    %98 = vmatpush1.msra.mxu0 %v46
    %99 = vmatprep.subr.mxu0 0.0
    %100 = vmatpush1.msra.mxu0 %v47
    %101 = vmatprep.subr.mxu0 0.0
    %102 = vmatpush1.msra.mxu0 %v48
    %103 = vmatprep.subr.mxu0 0.0
    %104 = vmatpush1.msra.mxu0 %v49
    %105 = vmatprep.subr.mxu0 0.0
    %106 = vmatpush1.msra.mxu0 %v50
    %107 = vmatprep.subr.mxu0 0.0
    %108 = vmatpush1.msra.mxu0 %v51
    %109 = vmatprep.subr.mxu0 0.0
    %110 = vmatpush1.msra.mxu0 %v52
    %111 = vmatprep.subr.mxu0 0.0
    %112 = vmatpush1.msra.mxu0 %v53
    %113 = vmatprep.subr.mxu0 0.0
    %114 = vmatpush1.msra.mxu0 %v54
    %115 = vmatprep.subr.mxu0 0.0
    %116 = vmatpush1.msra.mxu0 %v55
    %117 = vmatprep.subr.mxu0 0.0
    %118 = vmatpush1.msra.mxu0 %v56
    %119 = vmatprep.subr.mxu0 0.0
    %120 = vmatpush1.msra.mxu0 %v57
    %121 = vmatprep.subr.mxu0 0.0
    %122 = vmatpush1.msra.mxu0 %v58
    %123 = vmatprep.mubr.f32.mxu0 %v26
    %124 = vmatmul.mubr.f32.gmra.mrb[0].mxu0 %v25
    %v125 = vpop.f32.mrb[0].mxu0
    %v126 = vadd.f32 0.0, %v125
    %v127 = vpop.f32.mrb[0].mxu0
    %128 = vdwg.mxu0
    %vm129 = vcmask 130048
    %130 = vst.msk [vmem:[%s2] sm:$0xff] %vm129, %v126
    // Predicated region
    $region14: #{_bilinear_resize_impl.1} parent=1 // pred_check
      _
    $region15: #{_bilinear_resize_impl.1} parent=1 // pred_check_branch
      %132 = sbr.rel (0) target = $region17
    $region16: #{_bilinear_resize_impl.1} parent=1 // pred_region
      _
    $region17: #{_bilinear_resize_impl.1} parent=1 // pred_fallthru
      _
    // Predicated region
    $region18: #{_bilinear_resize_impl.1} parent=1 // pred_check
      _
    $region19: #{_bilinear_resize_impl.1} parent=1 // pred_check_branch
      %134 = sbr.rel (0) target = $region21
    $region20: #{_bilinear_resize_impl.1} parent=1 // pred_region
      _
    $region21: #{_bilinear_resize_impl.1} parent=1 // pred_fallthru
      _
    %135 = vsyncpa [#allocation3], 1

</llo_original>
